<compile_context>
chip_gen: v5e
topology: v5e:2x2
jax: 0.10.0
libtpu: 0.0.40
codegen_flags: <defaults>
</compile_context>

<pallas_src>
import functools

import jax
import jax.numpy as jnp
from jax.experimental import pallas as pl
from jax.experimental.pallas import tpu as pltpu


def _round_up(n: int, m: int) -> int:
    return ((n + m - 1) // m) * m


# ----------------------------- kernels --------------------------------------


def _fused_kernel(x_ref, w1_ref, b1_ref, w2_ref, b2_ref, o_ref, *, sigmoid):
    # Hidden layer: h = relu(x @ W1 + b1)   (f32 accumulation on the MXU)
    h = jnp.dot(x_ref[...], w1_ref[...], preferred_element_type=jnp.float32)
    h = jnp.maximum(h + b1_ref[...], 0.0)          # b1 is (1, H_p), broadcasts
    # Output layer: y = h @ W2 + b2   (cast h back to the MXU operand dtype)
    y = jnp.dot(h.astype(w2_ref.dtype), w2_ref[...],
                preferred_element_type=jnp.float32)
    y = y + b2_ref[...]
    if sigmoid:
        y = jax.nn.sigmoid(y)                      # EUP slot -> effectively free
    o_ref[...] = y.astype(o_ref.dtype)


def _hidden_tiled_kernel(x_ref, w1_ref, b1_ref, w2_ref, b2_ref, o_ref, acc_ref,
                         *, sigmoid):
    # Grid = (batch tiles, hidden chunks).  Each hidden chunk computes
    # h_c = relu(x @ W1[:, c] + b1[c]) and accumulates y += h_c @ W2[c, :]
    # into an f32 VMEM scratch.  Exact: ReLU is elementwise over hidden units.
    k = pl.program_id(1)

    @pl.when(k == 0)
    def _():
        acc_ref[...] = jnp.zeros_like(acc_ref)

    h = jnp.dot(x_ref[...], w1_ref[...], preferred_element_type=jnp.float32)
    h = jnp.maximum(h + b1_ref[...], 0.0)
    acc_ref[...] += jnp.dot(h.astype(w2_ref.dtype), w2_ref[...],
                            preferred_element_type=jnp.float32)

    @pl.when(k == pl.num_programs(1) - 1)
    def _():
        y = acc_ref[...] + b2_ref[...]
        if sigmoid:
            y = jax.nn.sigmoid(y)
        o_ref[...] = y.astype(o_ref.dtype)


# ----------------------------- wrapper ---------------------------------------


def pred_head_forward(x, w1, b1, w2, b2, *, sigmoid=True, block_batch=256,
                      hidden_block=512, compute_dtype=jnp.bfloat16,
                      force_hidden_tiling=False):
    """Fused MLP head:  sigmoid?(relu(x @ w1 + b1) @ w2 + b2).

    x:  [B, D_in]
    w1: [D_in, D_in], b1: [D_in]
    w2: [D_in, D_out], b2: [D_out]

    compute_dtype: MXU operand dtype (default bf16: native MXU speed, ~3 decimal
    digits of operand precision). Accumulation and the epilogue stay f32.
    Pass compute_dtype=None to keep the input dtype for the matmul operands.
    """
    B, D_in = x.shape
    D_in_w, D_out = w2.shape
    assert w1.shape == (D_in, D_in) and D_in_w == D_in
    out_dtype = x.dtype
    out_itemsize = jnp.dtype(out_dtype).itemsize

    if compute_dtype is not None and jnp.dtype(compute_dtype) != x.dtype:
        x = x.astype(compute_dtype)
        w1 = w1.astype(compute_dtype)
        w2 = w2.astype(compute_dtype)
    itemsize = jnp.dtype(x.dtype).itemsize
    sublane = {4: 8, 2: 16, 1: 32}.get(itemsize, 8)

    # Lane-dense padded hidden / output widths (zero fill keeps math exact:
    # padded hidden cols get zero weight+bias -> relu(0)=0; padded out cols are
    # sliced off).  x itself stays unpadded in the lane dim.
    H_p = _round_up(D_in, 128)
    D_out_p = _round_up(D_out, 128)

    # Batch tile: multiple of the sublane pack, default 256 rows (fills the
    # 256-wide MXU on v6e/v7x); force >= 2 grid steps when the batch allows it
    # so the "parallel" axis can shard across v7x's two TensorCores.
    B_r = _round_up(B, sublane)
    TB = min(_round_up(max(block_batch, sublane), sublane), B_r)
    if _round_up(B, TB) // TB < 2 and B_r >= 2 * sublane:
        TB = _round_up((B + 1) // 2, sublane)
    B_p = _round_up(B, TB)

    # Generation-aware VMEM ceiling (v7x: 64 MiB physical, v5e/v6e: 128 MiB).
    try:
        phys_vmem = int(pltpu.get_tpu_info().vmem_capacity_bytes)
    except Exception:
        phys_vmem = 64 << 20
    vmem_ceiling = int(0.85 * phys_vmem)

    # Fused-path footprint: resident weights (single buffer) + pipelined
    # activation/out tiles + f32 intermediates.
    fused_bytes = (
        (D_in * H_p + H_p * D_out_p) * itemsize
        + (H_p + D_out_p) * 4
        + 2 * TB * D_in * itemsize
        + 2 * TB * D_out_p * out_itemsize
        + TB * (H_p + D_out_p) * 4
    )
    use_hidden_tiling = force_hidden_tiling or fused_bytes > int(0.7 * vmem_ceiling)

    # Pad: batch rows of x (cheap), weights/biases to lane-dense shapes.
    # TODO(synk): cache padded/cast weights across calls instead of re-padding.
    x_p = x if B_p == B else jnp.pad(x, ((0, B_p - B), (0, 0)))
    w1_p = jnp.pad(w1, ((0, 0), (0, H_p - D_in)))
    w2_p = jnp.pad(w2, ((0, H_p - D_in), (0, D_out_p - D_out)))
    b1_p = jnp.pad(b1.reshape(1, D_in).astype(jnp.float32),
                   ((0, 0), (0, H_p - D_in)))
    b2_p = jnp.pad(b2.reshape(1, D_out).astype(jnp.float32),
                   ((0, 0), (0, D_out_p - D_out)))

    cost = pl.CostEstimate(
        flops=2 * B_p * D_in * H_p + 2 * B_p * H_p * D_out_p,
        transcendentals=(B_p * D_out_p) if sigmoid else 0,
        bytes_accessed=(x_p.size * itemsize + w1_p.size * itemsize
                        + w2_p.size * itemsize + b1_p.size * 4 + b2_p.size * 4
                        + B_p * D_out_p * out_itemsize),
    )

    if not use_hidden_tiling:
        # ---------------- fused path: all weights resident in VMEM ----------
        vmem_est = (
            2 * TB * D_in * itemsize
            + 2 * TB * D_out_p * out_itemsize
            + 2 * (D_in * H_p + H_p * D_out_p) * itemsize
            + 2 * (H_p + D_out_p) * 4
            + TB * (H_p + D_out_p) * 4
        )
        vmem_limit = int(min(max(32 << 20, 2 * vmem_est), vmem_ceiling))
        kernel = functools.partial(_fused_kernel, sigmoid=sigmoid)

        def build(resident_mode):
            kw = {} if resident_mode is None else {"pipeline_mode": resident_mode}
            return pl.pallas_call(
                kernel,
                out_shape=jax.ShapeDtypeStruct((B_p, D_out_p), out_dtype),
                grid_spec=pltpu.PrefetchScalarGridSpec(
                    num_scalar_prefetch=0,
                    grid=(B_p // TB,),
                    in_specs=[
                        # Activations: tiled over batch -> pipelined, unpadded
                        # lane dim (full-array last dim is a legal block).
                        pl.BlockSpec((TB, D_in), lambda i: (i, 0)),
                        # Weights/biases: constant block index -> resident.
                        pl.BlockSpec((D_in, H_p), lambda i: (0, 0), **kw),
                        pl.BlockSpec((1, H_p), lambda i: (0, 0), **kw),
                        pl.BlockSpec((H_p, D_out_p), lambda i: (0, 0), **kw),
                        pl.BlockSpec((1, D_out_p), lambda i: (0, 0), **kw),
                    ],
                    out_specs=pl.BlockSpec((TB, D_out_p), lambda i: (i, 0)),
                ),
                compiler_params=pltpu.CompilerParams(
                    dimension_semantics=("parallel",),   # megacore-shardable
                    vmem_limit_bytes=vmem_limit,
                ),
                cost_estimate=cost,
            )

        try:
            # Single-buffer the resident weights/biases (halves their VMEM).
            out_p = build(pl.Buffered(1))(x_p, w1_p, b1_p, w2_p, b2_p)
        except Exception:
            # Fallback: default (double-buffered) pipeline mode.
            out_p = build(None)(x_p, w1_p, b1_p, w2_p, b2_p)
    else:
        # ------------- hidden-dim-tiled path: stream W1/W2 chunks -----------
        TK = min(_round_up(max(hidden_block, 128), 128), H_p)
        if H_p % TK != 0:
            TK = 128
        vmem_est = (
            2 * TB * D_in * itemsize
            + 2 * (D_in * TK + TK * D_out_p) * itemsize
            + 2 * (TK + D_out_p) * 4
            + 2 * TB * D_out_p * out_itemsize
            + TB * (TK + D_out_p) * 4
        )
        vmem_limit = int(min(max(32 << 20, 2 * vmem_est), vmem_ceiling))
        kernel = functools.partial(_hidden_tiled_kernel, sigmoid=sigmoid)
        out_p = pl.pallas_call(
            kernel,
            out_shape=jax.ShapeDtypeStruct((B_p, D_out_p), out_dtype),
            grid_spec=pltpu.PrefetchScalarGridSpec(
                num_scalar_prefetch=0,
                grid=(B_p // TB, H_p // TK),
                in_specs=[
                    pl.BlockSpec((TB, D_in), lambda i, k: (i, 0)),
                    pl.BlockSpec((D_in, TK), lambda i, k: (0, k)),
                    pl.BlockSpec((1, TK), lambda i, k: (0, k)),
                    pl.BlockSpec((TK, D_out_p), lambda i, k: (k, 0)),
                    pl.BlockSpec((1, D_out_p), lambda i, k: (0, 0)),
                ],
                out_specs=pl.BlockSpec((TB, D_out_p), lambda i, k: (i, 0)),
                scratch_shapes=[pltpu.VMEM((TB, D_out_p), jnp.float32)],
            ),
            compiler_params=pltpu.CompilerParams(
                dimension_semantics=("parallel", "arbitrary"),
                vmem_limit_bytes=vmem_limit,
            ),
            cost_estimate=cost,
        )(x_p, w1_p, b1_p, w2_p, b2_p)

    return out_p[:B, :D_out]


# ----------------------------- test helpers ----------------------------------


def init_params(key, input_dim, output_dim, dtype=jnp.float32):
    """Deterministic synthetic init mimicking nn.Linear's shapes."""
    k1, k2, k3, k4 = jax.random.split(key, 4)
    lim1 = 1.0 / jnp.sqrt(input_dim)
    w1 = jax.random.uniform(k1, (input_dim, input_dim), dtype, -lim1, lim1)
    b1 = jax.random.uniform(k2, (input_dim,), dtype, -lim1, lim1)
    w2 = jax.random.uniform(k3, (input_dim, output_dim), dtype, -lim1, lim1)
    b2 = jax.random.uniform(k4, (output_dim,), dtype, -lim1, lim1)
    return w1, b1, w2, b2


def reference_forward(x, w1, b1, w2, b2, sigmoid=True, compute_dtype=None):
    """Pure-JAX reference that mirrors the kernel's operand casts."""
    if compute_dtype is not None:
        xc, w1c, w2c = (x.astype(compute_dtype), w1.astype(compute_dtype),
                        w2.astype(compute_dtype))
    else:
        xc, w1c, w2c = x, w1, w2
    h = jnp.maximum(
        jnp.dot(xc, w1c, preferred_element_type=jnp.float32)
        + b1.astype(jnp.float32), 0.0)
    y = (jnp.dot(h.astype(w2c.dtype), w2c, preferred_element_type=jnp.float32)
         + b2.astype(jnp.float32))
    y = jax.nn.sigmoid(y) if sigmoid else y
    return y.astype(x.dtype)


if __name__ == "__main__":
    key = jax.random.PRNGKey(0)
    kx, kp, kx2, kp2 = jax.random.split(key, 4)

    # Small shapes consistent with the module (batch of feature vectors).
    batch, input_dim, output_dim = 64, 32, 8
    x = jax.random.normal(kx, (batch, input_dim), jnp.float32)
    w1, b1, w2, b2 = init_params(kp, input_dim, output_dim)

    # 1) Fused path, default bf16 MXU operands, sigmoid on (2-step batch grid).
    out = jax.block_until_ready(pred_head_forward(x, w1, b1, w2, b2, sigmoid=True))
    ref = reference_forward(x, w1, b1, w2, b2, sigmoid=True,
                            compute_dtype=jnp.bfloat16)
    assert out.shape == (batch, output_dim)
    assert jnp.allclose(out, ref, atol=2e-4, rtol=2e-4), "mismatch (fused bf16)"

    # 2) Fused path, f32 operands, no sigmoid.
    out2 = jax.block_until_ready(
        pred_head_forward(x, w1, b1, w2, b2, sigmoid=False,
                          compute_dtype=jnp.float32))
    ref2 = reference_forward(x, w1, b1, w2, b2, sigmoid=False, compute_dtype=None)
    assert jnp.allclose(out2, ref2, atol=2e-3, rtol=2e-3), "mismatch (fused f32)"

    # 3) Hidden-dim-tiled large-D_in path, forced at small shapes (2x2 grid).
    input_dim2 = 256
    x2 = jax.random.normal(kx2, (batch, input_dim2), jnp.float32)
    w1b, b1b, w2b, b2b = init_params(kp2, input_dim2, output_dim)
    out3 = jax.block_until_ready(
        pred_head_forward(x2, w1b, b1b, w2b, b2b, sigmoid=True,
                          hidden_block=128, force_hidden_tiling=True))
    ref3 = reference_forward(x2, w1b, b1b, w2b, b2b, sigmoid=True,
                             compute_dtype=jnp.bfloat16)
    assert out3.shape == (batch, output_dim)
    assert jnp.allclose(out3, ref3, atol=5e-4, rtol=5e-4), "mismatch (hidden-tiled)"

    print("KERNEL_OK")
</pallas_src>

<mosaic_0001>
module attributes {stable_mosaic.version = 11 : i64} {
  func.func @_fused_kernel(%arg0: i32, %arg1: memref<32x32xbf16, #tpu.memory_space<vmem>>, %arg2: memref<32x128xbf16, #tpu.memory_space<vmem>>, %arg3: memref<1x128xf32, #tpu.memory_space<vmem>>, %arg4: memref<128x128xbf16, #tpu.memory_space<vmem>>, %arg5: memref<1x128xf32, #tpu.memory_space<vmem>>, %arg6: memref<32x128xf32, #tpu.memory_space<vmem>>) attributes {dimension_semantics = [#tpu.dimension_semantics<parallel>], iteration_bounds = array<i64: 2>, scalar_prefetch = 0 : i64, scratch_operands = 0 : i64, tpu.core_type = #tpu.core_type<tc>, window_params = [{transform_indices = @transform_0, window_bounds = array<i64: 32, 32>}, {pipeline_mode = #tpu.pipeline_mode<synchronous>, transform_indices = @transform_1, window_bounds = array<i64: 32, 128>}, {pipeline_mode = #tpu.pipeline_mode<synchronous>, transform_indices = @transform_2, window_bounds = array<i64: 1, 128>}, {pipeline_mode = #tpu.pipeline_mode<synchronous>, transform_indices = @transform_3, window_bounds = array<i64: 128, 128>}, {pipeline_mode = #tpu.pipeline_mode<synchronous>, transform_indices = @transform_4, window_bounds = array<i64: 1, 128>}, {transform_indices = @transform_5, window_bounds = array<i64: 32, 128>}]} {
    %c0 = arith.constant 0 : index
    %c0_0 = arith.constant 0 : index
    %0 = vector.load %arg1[%c0, %c0_0] : memref<32x32xbf16, #tpu.memory_space<vmem>>, vector<32x32xbf16>
    %c0_1 = arith.constant 0 : index
    %c0_2 = arith.constant 0 : index
    %1 = vector.load %arg2[%c0_1, %c0_2] : memref<32x128xbf16, #tpu.memory_space<vmem>>, vector<32x128xbf16>
    %cst = arith.constant dense<0.000000e+00> : vector<32x128xf32>
    %2 = tpu.matmul %0, %1, %cst {dimension_numbers = #tpu.dot_dimension_numbers<[1], [0], [0], [1], [0, 0, 1, 1], [], []>} : vector<32x32xbf16>, vector<32x128xbf16>, vector<32x128xf32> -> vector<32x128xf32>
    %c0_3 = arith.constant 0 : index
    %c0_4 = arith.constant 0 : index
    %3 = vector.load %arg3[%c0_3, %c0_4] : memref<1x128xf32, #tpu.memory_space<vmem>>, vector<1x128xf32>
    %4 = vector.broadcast %3 : vector<1x128xf32> to vector<32x128xf32>
    %5 = arith.addf %2, %4 : vector<32x128xf32>
    %cst_5 = arith.constant 0.000000e+00 : f32
    %6 = vector.broadcast %cst_5 : f32 to vector<32x128xf32>
    %7 = arith.maximumf %5, %6 : vector<32x128xf32>
    %8 = arith.truncf %7 : vector<32x128xf32> to vector<32x128xbf16>
    %c0_6 = arith.constant 0 : index
    %c0_7 = arith.constant 0 : index
    %9 = vector.load %arg4[%c0_6, %c0_7] : memref<128x128xbf16, #tpu.memory_space<vmem>>, vector<128x128xbf16>
    %cst_8 = arith.constant dense<0.000000e+00> : vector<32x128xf32>
    %10 = tpu.matmul %8, %9, %cst_8 {dimension_numbers = #tpu.dot_dimension_numbers<[1], [0], [0], [1], [0, 0, 1, 1], [], []>} : vector<32x128xbf16>, vector<128x128xbf16>, vector<32x128xf32> -> vector<32x128xf32>
    %c0_9 = arith.constant 0 : index
    %c0_10 = arith.constant 0 : index
    %11 = vector.load %arg5[%c0_9, %c0_10] : memref<1x128xf32, #tpu.memory_space<vmem>>, vector<1x128xf32>
    %12 = vector.broadcast %11 : vector<1x128xf32> to vector<32x128xf32>
    %13 = arith.addf %10, %12 : vector<32x128xf32>
    %14 = arith.negf %13 : vector<32x128xf32>
    %15 = math.exp %14 : vector<32x128xf32>
    %cst_11 = arith.constant 1.000000e+00 : f32
    %16 = vector.broadcast %cst_11 : f32 to vector<32x128xf32>
    %17 = arith.addf %16, %15 : vector<32x128xf32>
    %18 = arith.divf %16, %17 : vector<32x128xf32>
    %c0_12 = arith.constant 0 : index
    %c0_13 = arith.constant 0 : index
    %19 = vector.load %arg6[%c0_12, %c0_13] : memref<32x128xf32, #tpu.memory_space<vmem>>, vector<32x128xf32>
    tpu.vector_store %arg6[%c0_12, %c0_13], %18 {strides = array<i32>} : memref<32x128xf32, #tpu.memory_space<vmem>>, vector<32x128xf32>,
    return
  }
  func.func @transform_0(%arg0: i32) -> (i32, i32) {
    %c0_i32 = arith.constant 0 : i32
    %c0_i32_0 = arith.constant 0 : i32
    return %arg0, %c0_i32 : i32, i32
  }
  func.func @transform_1(%arg0: i32) -> (i32, i32) {
    %c0_i32 = arith.constant 0 : i32
    %c0_i32_0 = arith.constant 0 : i32
    %c0_i32_1 = arith.constant 0 : i32
    return %c0_i32, %c0_i32_0 : i32, i32
  }
  func.func @transform_2(%arg0: i32) -> (i32, i32) {
    %c0_i32 = arith.constant 0 : i32
    %c0_i32_0 = arith.constant 0 : i32
    %c0_i32_1 = arith.constant 0 : i32
    return %c0_i32, %c0_i32_0 : i32, i32
  }
  func.func @transform_3(%arg0: i32) -> (i32, i32) {
    %c0_i32 = arith.constant 0 : i32
    %c0_i32_0 = arith.constant 0 : i32
    %c0_i32_1 = arith.constant 0 : i32
    return %c0_i32, %c0_i32_0 : i32, i32
  }
  func.func @transform_4(%arg0: i32) -> (i32, i32) {
    %c0_i32 = arith.constant 0 : i32
    %c0_i32_0 = arith.constant 0 : i32
    %c0_i32_1 = arith.constant 0 : i32
    return %c0_i32, %c0_i32_0 : i32, i32
  }
  func.func @transform_5(%arg0: i32) -> (i32, i32) {
    %c0_i32 = arith.constant 0 : i32
    %c0_i32_0 = arith.constant 0 : i32
    return %arg0, %c0_i32 : i32, i32
  }
}

module attributes {stable_mosaic.version = 11 : i64} {
  func.func @_fused_kernel(%arg0: i32, %arg1: memref<32x32xbf16, #tpu.memory_space<vmem>>, %arg2: memref<32x128xbf16, #tpu.memory_space<vmem>>, %arg3: memref<1x128xf32, #tpu.memory_space<vmem>>, %arg4: memref<128x128xbf16, #tpu.memory_space<vmem>>, %arg5: memref<1x128xf32, #tpu.memory_space<vmem>>, %arg6: memref<32x128xf32, #tpu.memory_space<vmem>>) attributes {dimension_semantics = [#tpu.dimension_semantics<parallel>], iteration_bounds = array<i64: 2>, scalar_prefetch = 0 : i64, scratch_operands = 0 : i64, tpu.core_type = #tpu.core_type<tc>, window_params = [{transform_indices = @transform_0, window_bounds = array<i64: 32, 32>}, {pipeline_mode = #tpu.pipeline_mode<synchronous>, transform_indices = @transform_1, window_bounds = array<i64: 32, 128>}, {pipeline_mode = #tpu.pipeline_mode<synchronous>, transform_indices = @transform_2, window_bounds = array<i64: 1, 128>}, {pipeline_mode = #tpu.pipeline_mode<synchronous>, transform_indices = @transform_3, window_bounds = array<i64: 128, 128>}, {pipeline_mode = #tpu.pipeline_mode<synchronous>, transform_indices = @transform_4, window_bounds = array<i64: 1, 128>}, {transform_indices = @transform_5, window_bounds = array<i64: 32, 128>}]} {
    %c0 = arith.constant 0 : index
    %c0_0 = arith.constant 0 : index
    %0 = vector.load %arg1[%c0, %c0_0] : memref<32x32xbf16, #tpu.memory_space<vmem>>, vector<32x32xbf16>
    %c0_1 = arith.constant 0 : index
    %c0_2 = arith.constant 0 : index
    %1 = vector.load %arg2[%c0_1, %c0_2] : memref<32x128xbf16, #tpu.memory_space<vmem>>, vector<32x128xbf16>
    %cst = arith.constant dense<0.000000e+00> : vector<32x128xf32>
    %2 = tpu.matmul %0, %1, %cst {dimension_numbers = #tpu.dot_dimension_numbers<[1], [0], [0], [1], [0, 0, 1, 1], [], []>} : vector<32x32xbf16>, vector<32x128xbf16>, vector<32x128xf32> -> vector<32x128xf32>
    %c0_3 = arith.constant 0 : index
    %c0_4 = arith.constant 0 : index
    %3 = vector.load %arg3[%c0_3, %c0_4] : memref<1x128xf32, #tpu.memory_space<vmem>>, vector<1x128xf32>
    %4 = vector.broadcast %3 : vector<1x128xf32> to vector<32x128xf32>
    %5 = arith.addf %2, %4 : vector<32x128xf32>
    %cst_5 = arith.constant 0.000000e+00 : f32
    %6 = vector.broadcast %cst_5 : f32 to vector<32x128xf32>
    %7 = arith.maximumf %5, %6 : vector<32x128xf32>
    %8 = arith.truncf %7 : vector<32x128xf32> to vector<32x128xbf16>
    %c0_6 = arith.constant 0 : index
    %c0_7 = arith.constant 0 : index
    %9 = vector.load %arg4[%c0_6, %c0_7] : memref<128x128xbf16, #tpu.memory_space<vmem>>, vector<128x128xbf16>
    %cst_8 = arith.constant dense<0.000000e+00> : vector<32x128xf32>
    %10 = tpu.matmul %8, %9, %cst_8 {dimension_numbers = #tpu.dot_dimension_numbers<[1], [0], [0], [1], [0, 0, 1, 1], [], []>} : vector<32x128xbf16>, vector<128x128xbf16>, vector<32x128xf32> -> vector<32x128xf32>
    %c0_9 = arith.constant 0 : index
    %c0_10 = arith.constant 0 : index
    %11 = vector.load %arg5[%c0_9, %c0_10] : memref<1x128xf32, #tpu.memory_space<vmem>>, vector<1x128xf32>
    %12 = vector.broadcast %11 : vector<1x128xf32> to vector<32x128xf32>
    %13 = arith.addf %10, %12 : vector<32x128xf32>
    %14 = arith.negf %13 : vector<32x128xf32>
    %15 = math.exp %14 : vector<32x128xf32>
    %cst_11 = arith.constant 1.000000e+00 : f32
    %16 = vector.broadcast %cst_11 : f32 to vector<32x128xf32>
    %17 = arith.addf %16, %15 : vector<32x128xf32>
    %18 = arith.divf %16, %17 : vector<32x128xf32>
    %c0_12 = arith.constant 0 : index
    %c0_13 = arith.constant 0 : index
    %19 = vector.load %arg6[%c0_12, %c0_13] : memref<32x128xf32, #tpu.memory_space<vmem>>, vector<32x128xf32>
    tpu.vector_store %arg6[%c0_12, %c0_13], %18 {strides = array<i32>} : memref<32x128xf32, #tpu.memory_space<vmem>>, vector<32x128xf32>,
    return
  }
  func.func @transform_0(%arg0: i32) -> (i32, i32) {
    %c0_i32 = arith.constant 0 : i32
    %c0_i32_0 = arith.constant 0 : i32
    return %arg0, %c0_i32 : i32, i32
  }
  func.func @transform_1(%arg0: i32) -> (i32, i32) {
    %c0_i32 = arith.constant 0 : i32
    %c0_i32_0 = arith.constant 0 : i32
    %c0_i32_1 = arith.constant 0 : i32
    return %c0_i32, %c0_i32_0 : i32, i32
  }
  func.func @transform_2(%arg0: i32) -> (i32, i32) {
    %c0_i32 = arith.constant 0 : i32
    %c0_i32_0 = arith.constant 0 : i32
    %c0_i32_1 = arith.constant 0 : i32
    return %c0_i32, %c0_i32_0 : i32, i32
  }
  func.func @transform_3(%arg0: i32) -> (i32, i32) {
    %c0_i32 = arith.constant 0 : i32
    %c0_i32_0 = arith.constant 0 : i32
    %c0_i32_1 = arith.constant 0 : i32
    return %c0_i32, %c0_i32_0 : i32, i32
  }
  func.func @transform_4(%arg0: i32) -> (i32, i32) {
    %c0_i32 = arith.constant 0 : i32
    %c0_i32_0 = arith.constant 0 : i32
    %c0_i32_1 = arith.constant 0 : i32
    return %c0_i32, %c0_i32_0 : i32, i32
  }
  func.func @transform_5(%arg0: i32) -> (i32, i32) {
    %c0_i32 = arith.constant 0 : i32
    %c0_i32_0 = arith.constant 0 : i32
    return %arg0, %c0_i32 : i32, i32
  }
}

</mosaic_0001>

<llo_original>
// kernel: tpu_custom_call.1
$region0: #{tpu_custom_call.1}
  #allocation0 [shape = 'u32[]', space=smem, size = 0x4, offset = 0x4, fixed_abs, tag = 'smem constant byte address 0x4 - core index']
  #allocation1 [shape = 'u32[72,128]{1,0:T(1,128)}', space=vmem, size = 0x9000, scoped, tag = 'internal scratch']
  %s0 = inlined_call_operand.vmem [shape: bf16[64,32], index: 0, kind: input, shape index: {}]
  %s1 = inlined_call_operand.vmem [shape: bf16[32,128], index: 1, kind: input, shape index: {}]
  %s2 = inlined_call_operand.vmem [shape: f32[1,128], index: 2, kind: input, shape index: {}]
  %s3 = inlined_call_operand.hbm [shape: bf16[128,128], index: 3, kind: input, shape index: {}]
  %s4 = inlined_call_operand.vmem [shape: f32[1,128], index: 4, kind: input, shape index: {}]
  %s5 = inlined_call_operand.hbm [shape: f32[64,128], index: 5, kind: output, shape index: {}]
  %s6 = sld [smem:[#allocation0]]
  $region57: #{tpu_custom_call.1} parent=0
    _
  %s8 = ssub.s32 1, %s6
  %s9 = scalar_select 0, %s8, %s6
  $region1: #{tpu_custom_call.1} parent=0
    #allocation2 [shape = 'u8[32768]{0}', space=vmem, size = 0x8000, scoped, tag = 'input window, operand 3, single buffered']
    #allocation3 [shape = 's32[2]{0}', space=sflag, size = 0x8, scoped, tag = 'scoped memory for tpu_custom_call.1']
    #allocation4 [shape = 's32[2]{0}', space=sflag, size = 0x8, scoped, tag = 'scoped memory for tpu_custom_call.1']
    #allocation5 [shape = 'u8[32768]{0}', space=vmem, size = 0x8000, scoped, tag = 'output window, operand 0']
    %10 = vsyncpa [#allocation3], 0
    %11 = vsyncpa [#allocation4], 0
    %s12 = scalar_lea.sflag [#allocation4], 1
    %13 = vsyncpa %s12, 0
    loop: start=0, step=1, limit=4
    $region2: #{tpu_custom_call.1} parent=1 // loop_pre_header
      _
    $region3: #{tpu_custom_call.1} parent=1 // loop_header
      %s15 = sphi 0, %s19
      %p16 = scmp.ge.s32.totalorder %s15, 4
      %s25 = sphi 0, %s27
      %s28 = sphi 0, %s25
      %s29 = sphi 0, %s28
      %s45 = sphi 0, %s29
      %s49 = sphi 0, %s49
      %s51 = sphi 0, %s49
      %s52 = sphi 0, %s51
      %s66 = sphi 0, %s52
      %s70 = sphi 0, %s70
      %s72 = sphi 0, %s70
      %s73 = sphi 0, %s72
      %s87 = sphi 0, %s73
      %s91 = sphi 0, %s91
      %s93 = sphi 0, %s91
      %s94 = sphi 0, %s93
      %s108 = sphi 0, %s94
      %s112 = sphi 0, %s112
      %s114 = sphi 0, %s112
      %s115 = sphi 0, %s114
      %s129 = sphi 0, %s115
      %s135 = sphi 0, %s137
      %s138 = sphi 0, %s135
      %s139 = sphi 0, %s138
      %s155 = sphi 0, %s139
    $region4: #{tpu_custom_call.1} parent=1 // loop_header_branch
      %18 = sbr.rel (%p16) target = $region8
    $region5: #{tpu_custom_call.1} parent=1 // loop_body
      %s20 = ssub.s32 %s15, 1
      %s21 = ssub.s32 %s15, 2
      %s22 = sadd.s32 %s15, 1
      %s23 = ssub.s32 %s15, %s22
      %p24 = scmp.eq.s32.totalorder %s23, 0
      %s26 = sadd.s32 %s25, 1
      %s27 = scalar_select %p24, %s25, %s26
      %p30 = pneg %p24
      %p31 = scmp.eq.s32.totalorder %s15, 1
      %p32 = por %p30, %p31
      %p33 = scmp.ne.s32.totalorder %s25, %s28
      %p34 = scmp.eq.s32.totalorder %s15, 0
      %p35 = por %p33, %p34
      %p36 = scmp.ne.s32.totalorder %s25, %s28
      %p37 = scmp.eq.s32.totalorder %s20, 1
      %p38 = por %p36, %p37
      %p39 = scmp.ne.s32.totalorder %s28, %s29
      %p40 = scmp.eq.s32.totalorder %s20, 0
      %p41 = por %p39, %p40
      %p42 = scmp.ne.s32.totalorder %s28, %s29
      %p43 = scmp.eq.s32.totalorder %s21, 1
      %p44 = por %p42, %p43
      %p46 = scmp.ne.s32.totalorder %s29, %s45
      %p47 = scmp.eq.s32.totalorder %s21, 0
      %p48 = por %p46, %p47
      %s50 = sadd.s32 %s49, 1
      %p53 = scmp.eq.s32.totalorder %s15, 1
      %p54 = scmp.ne.s32.totalorder %s49, %s51
      %p55 = scmp.eq.s32.totalorder %s15, 0
      %p56 = por %p54, %p55
      %p57 = scmp.ne.s32.totalorder %s49, %s51
      %p58 = scmp.eq.s32.totalorder %s20, 1
      %p59 = por %p57, %p58
      %p60 = scmp.ne.s32.totalorder %s51, %s52
      %p61 = scmp.eq.s32.totalorder %s20, 0
      %p62 = por %p60, %p61
      %p63 = scmp.ne.s32.totalorder %s51, %s52
      %p64 = scmp.eq.s32.totalorder %s21, 1
      %p65 = por %p63, %p64
      %p67 = scmp.ne.s32.totalorder %s52, %s66
      %p68 = scmp.eq.s32.totalorder %s21, 0
      %p69 = por %p67, %p68
      %s71 = sadd.s32 %s70, 1
      %p74 = scmp.eq.s32.totalorder %s15, 1
      %p75 = scmp.ne.s32.totalorder %s70, %s72
      %p76 = scmp.eq.s32.totalorder %s15, 0
      %p77 = por %p75, %p76
      %p78 = scmp.ne.s32.totalorder %s70, %s72
      %p79 = scmp.eq.s32.totalorder %s20, 1
      %p80 = por %p78, %p79
      %p81 = scmp.ne.s32.totalorder %s72, %s73
      %p82 = scmp.eq.s32.totalorder %s20, 0
      %p83 = por %p81, %p82
      %p84 = scmp.ne.s32.totalorder %s72, %s73
      %p85 = scmp.eq.s32.totalorder %s21, 1
      %p86 = por %p84, %p85
      %p88 = scmp.ne.s32.totalorder %s73, %s87
      %p89 = scmp.eq.s32.totalorder %s21, 0
      %p90 = por %p88, %p89
      %s92 = sadd.s32 %s91, 1
      %p95 = scmp.eq.s32.totalorder %s15, 1
      %p96 = scmp.ne.s32.totalorder %s91, %s93
      %p97 = scmp.eq.s32.totalorder %s15, 0
      %p98 = por %p96, %p97
      %p99 = scmp.ne.s32.totalorder %s91, %s93
      %p100 = scmp.eq.s32.totalorder %s20, 1
      %p101 = por %p99, %p100
      %p102 = scmp.ne.s32.totalorder %s93, %s94
      %p103 = scmp.eq.s32.totalorder %s20, 0
      %p104 = por %p102, %p103
      %p105 = scmp.ne.s32.totalorder %s93, %s94
      %p106 = scmp.eq.s32.totalorder %s21, 1
      %p107 = por %p105, %p106
      %p109 = scmp.ne.s32.totalorder %s94, %s108
      %p110 = scmp.eq.s32.totalorder %s21, 0
      %p111 = por %p109, %p110
      %s113 = sadd.s32 %s112, 1
      %p116 = scmp.eq.s32.totalorder %s15, 1
      %p117 = scmp.ne.s32.totalorder %s112, %s114
      %p118 = scmp.eq.s32.totalorder %s15, 0
      %p119 = por %p117, %p118
      %p120 = scmp.ne.s32.totalorder %s112, %s114
      %p121 = scmp.eq.s32.totalorder %s20, 1
      %p122 = por %p120, %p121
      %p123 = scmp.ne.s32.totalorder %s114, %s115
      %p124 = scmp.eq.s32.totalorder %s20, 0
      %p125 = por %p123, %p124
      %p126 = scmp.ne.s32.totalorder %s114, %s115
      %p127 = scmp.eq.s32.totalorder %s21, 1
      %p128 = por %p126, %p127
      %p130 = scmp.ne.s32.totalorder %s115, %s129
      %p131 = scmp.eq.s32.totalorder %s21, 0
      %p132 = por %p130, %p131
      %s133 = ssub.s32 %s15, %s22
      %p134 = scmp.eq.s32.totalorder %s133, 0
      %s136 = sadd.s32 %s135, 1
      %s137 = scalar_select %p134, %s135, %s136
      %p140 = pneg %p134
      %p141 = scmp.eq.s32.totalorder %s15, 1
      %p142 = por %p140, %p141
      %p143 = scmp.ne.s32.totalorder %s135, %s138
      %p144 = scmp.eq.s32.totalorder %s15, 0
      %p145 = por %p143, %p144
      %p146 = scmp.ne.s32.totalorder %s135, %s138
      %p147 = scmp.eq.s32.totalorder %s20, 1
      %p148 = por %p146, %p147
      %p149 = scmp.ne.s32.totalorder %s138, %s139
      %p150 = scmp.eq.s32.totalorder %s20, 0
      %p151 = por %p149, %p150
      %p152 = scmp.ne.s32.totalorder %s138, %s139
      %p153 = scmp.eq.s32.totalorder %s21, 1
      %p154 = por %p152, %p153
      %p156 = scmp.ne.s32.totalorder %s139, %s155
      %p157 = scmp.eq.s32.totalorder %s21, 0
      %p158 = por %p156, %p157
      %p159 = scmp.le.s32.totalorder 1, %s15
      %p160 = scmp.lt.s32.totalorder %s15, 3
      %p161 = pnand %p159, %p160
      %p162 = pneg %p161
      // Predicated region
      $region9: #{tpu_custom_call.1} parent=5 // pred_check
        _
      $region10: #{tpu_custom_call.1} parent=5 // pred_check_branch
        %164 = sbr.rel (%p161) target = $region12
      $region11: #{tpu_custom_call.1} parent=5 // pred_region
        %s165 = ssub.s32 %s15, 1
        // Predicated region
        $region13: #{tpu_custom_call.1} parent=11 // pred_check
          %p166 = pneg %p62
        $region14: #{tpu_custom_call.1} parent=11 // pred_check_branch
          %168 = sbr.rel (%p166) target = $region16
        $region15: #{tpu_custom_call.1} parent=11 // pred_region
          _
        $region16: #{tpu_custom_call.1} parent=11 // pred_fallthru
          _
        // Predicated region
        $region17: #{tpu_custom_call.1} parent=11 // pred_check
          %p169 = pneg %p83
        $region18: #{tpu_custom_call.1} parent=11 // pred_check_branch
          %171 = sbr.rel (%p169) target = $region20
        $region19: #{tpu_custom_call.1} parent=11 // pred_region
          _
        $region20: #{tpu_custom_call.1} parent=11 // pred_fallthru
          _
        // Predicated region
        $region21: #{tpu_custom_call.1} parent=11 // pred_check
          %p172 = pneg %p104
        $region22: #{tpu_custom_call.1} parent=11 // pred_check_branch
          %174 = sbr.rel (%p172) target = $region24
        $region23: #{tpu_custom_call.1} parent=11 // pred_region
          %176 = vsyncadd [#allocation3], 0
          %s177 = sshll.u32 %s3, 4
          %s178 = int_to_ptr.hbm [resolvable:$true] %s177
          %s179 = sshll.u32 [#allocation2], 4
          %s180 = int_to_ptr.vmem [resolvable:$true] %s179
          %185 = dma.hbm_to_vmem [thread:$0]  %s178, 1024, %s180, [#allocation3], 64, 64, 4
        $region24: #{tpu_custom_call.1} parent=11 // pred_fallthru
          _
        // Predicated region
        $region25: #{tpu_custom_call.1} parent=11 // pred_check
          %p186 = pneg %p125
        $region26: #{tpu_custom_call.1} parent=11 // pred_check_branch
          %188 = sbr.rel (%p186) target = $region28
        $region27: #{tpu_custom_call.1} parent=11 // pred_region
          _
        $region28: #{tpu_custom_call.1} parent=11 // pred_fallthru
          _
      $region12: #{tpu_custom_call.1} parent=5 // pred_fallthru
        _
      %p189 = scmp.lt.s32.totalorder %s15, 2
      // Predicated region
      $region29: #{tpu_custom_call.1} parent=5 // pred_check
        %p190 = pneg %p189
      $region30: #{tpu_custom_call.1} parent=5 // pred_check_branch
        %192 = sbr.rel (%p190) target = $region32
      $region31: #{tpu_custom_call.1} parent=5 // pred_region
        // Predicated region
        $region33: #{tpu_custom_call.1} parent=31 // pred_check
          %p193 = pneg %p35
        $region34: #{tpu_custom_call.1} parent=31 // pred_check_branch
          %195 = sbr.rel (%p193) target = $region36
        $region35: #{tpu_custom_call.1} parent=31 // pred_region
          %s196 = smul.u32 4, %s15
          %p197 = scmp.lt.s32.totalorder %s196, 7
          %s198 = scalar_select %p197, %s196, 7
          %s199 = smul.addr %s198, 4
          %s200 = scalar_lea.vmem %s0, %s199
          %s201 = smul.u32 4, %s15
        $region36: #{tpu_custom_call.1} parent=31 // pred_fallthru
          _
      $region32: #{tpu_custom_call.1} parent=5 // pred_fallthru
        _
      %p202 = scmp.le.s32.totalorder 1, %s15
      %p203 = scmp.lt.s32.totalorder %s15, 3
      %p204 = pnand %p202, %p203
      %p205 = pneg %p204
      // Predicated region
      $region37: #{tpu_custom_call.1} parent=5 // pred_check
        _
      $region38: #{tpu_custom_call.1} parent=5 // pred_check_branch
        %207 = sbr.rel (%p204) target = $region40
      $region39: #{tpu_custom_call.1} parent=5 // pred_region
        %s208 = ssub.s32 %s15, 1
        // Predicated region
        $region41: #{tpu_custom_call.1} parent=39 // pred_check
          %p209 = pneg %p104
        $region42: #{tpu_custom_call.1} parent=39 // pred_check_branch
          %211 = sbr.rel (%p209) target = $region44
        $region43: #{tpu_custom_call.1} parent=39 // pred_region
          %213 = dma.done [#allocation3], 1024
        $region44: #{tpu_custom_call.1} parent=39 // pred_fallthru
          _
        %s214 = smul.u32 4, %s20
        %p215 = scmp.lt.s32.totalorder %s214, 7
        %s216 = scalar_select %p215, %s214, 7
        %s217 = smul.addr %s216, 4
        %s218 = scalar_lea.vmem %s0, %s217
        %p219 = pneg %p41
        %p220 = pneg %p38
        %p221 = pneg %p62
        %p222 = pneg %p59
        %p223 = pneg %p83
        %p224 = pneg %p80
        %p225 = pneg %p104
        %p226 = pneg %p101
        %p227 = pneg %p125
        %p228 = pneg %p122
        %p229 = pneg %p151
        %p230 = pneg %p148
        %s231 = sand.u32 %s138, 1
        %s232 = scalar_lea.sflag [#allocation4], %s231
        %s233 = sand.u32 %s138, 1
        %s234 = smul.addr %s233, 32
        %s235 = scalar_lea.vmem [#allocation5], %s234
        %s236 = smul.u32 4, %s20
        %p237 = scmp.lt.s32.totalorder %s236, 7
        %s238 = scalar_select %p237, %s236, 7
        %s239 = smul.addr %s238, 4
        %s240 = scalar_lea.vmem %s0, %s239
        %s241 = smul.u32 4, %s20
        %s242 = smul.u32 4, %s20
        %v244 = vld [vmem:[%s240] sm:$0xf]
        %v245 = vld [vmem:[%s240 + $0x4] sm:$0xf]
        %v246 = vld [vmem:[%s240 + $0x8] sm:$0xf]
        %v247 = vld [vmem:[%s240 + $0xc] sm:$0xf]
        %v248 = vld [vmem:[%s1] sm:$0xf]
        %v249 = vld [vmem:[%s1 + $0x4] sm:$0xf]
        %v250 = vld [vmem:[%s1 + $0x8] sm:$0xf]
        %v251 = vld [vmem:[%s1 + $0xc] sm:$0xf]
        %v252 = vld [vmem:[%s2] sm:$0x1]
        %v254 = vperm.slane %v252, 0
        %v260 = vunpack.c.l.b16 %v244
        %v261 = vunpack.c.l.b16 %v245
        %v262 = vunpack.c.l.b16 %v246
        %v263 = vunpack.c.l.b16 %v247
        %v264 = vpack.c.b16 %v261, %v260
        %v265 = vpack.c.b16 %v263, %v262
        %v270 = vunpack.c.l.b16 %v248
        %v271 = vunpack.c.l.b16 %v249
        %v272 = vunpack.c.l.b16 %v250
        %v273 = vunpack.c.l.b16 %v251
        %v274 = vpack.c.b16 %v271, %v270
        %v275 = vpack.c.b16 %v273, %v272
        %vm278 = vcmask 261120
        %v280 = vsel %vm278, %v264, 0
        %v283 = vsel %vm278, %v265, 0
        %285 = vmatpush.bf16.msra.mxu0 0
        %286 = vmatpush.bf16.msra.mxu0 0
        %287 = vmatpush.bf16.msra.mxu0 0
        %288 = vmatpush.bf16.msra.mxu0 0
        %289 = vmatpush.bf16.msra.mxu0 0
        %290 = vmatpush.bf16.msra.mxu0 0
        %291 = vmatpush.bf16.msra.mxu0 %v275
        %292 = vmatpush.bf16.msra.mxu0 %v274
        %293 = vmatmul.bf16.gmra.mxu0 %v280
        %v294 = vpop.f32.mrf.mxu0
        %v295 = vadd.f32 %v254, %v294
        %v296 = vpop.f32.mrf.mxu0
        %v297 = vadd.f32 %v254, %v296
        %298 = vmatmul.bf16.gmra.mxu0 %v283
        %v299 = vpop.f32.mrf.mxu0
        %v300 = vadd.f32 %v254, %v299
        %v301 = vpop.f32.mrf.mxu0
        %v302 = vadd.f32 %v254, %v301
        %303 = vdwg.mxu0
        %v304 = vmax.f32 %v295, 0.0
        %v305 = vmax.f32 %v297, 0.0
        %v306 = vmax.f32 %v300, 0.0
        %v307 = vmax.f32 %v302, 0.0
        %v308 = vpack.c.bf16 %v305, %v304
        %v309 = vpack.c.bf16 %v307, %v306
        %v310 = vld [vmem:[#allocation2] sm:$0xf]
        %v311 = vld [vmem:[#allocation2 + $0x4] sm:$0xf]
        %v312 = vld [vmem:[#allocation2 + $0x8] sm:$0xf]
        %v313 = vld [vmem:[#allocation2 + $0xc] sm:$0xf]
        %v314 = vld [vmem:[#allocation2 + $0x10] sm:$0xf]
        %v315 = vld [vmem:[#allocation2 + $0x14] sm:$0xf]
        %v316 = vld [vmem:[#allocation2 + $0x18] sm:$0xf]
        %v317 = vld [vmem:[#allocation2 + $0x1c] sm:$0xf]
        %v318 = vld [vmem:[#allocation2 + $0x20] sm:$0xf]
        %v319 = vld [vmem:[#allocation2 + $0x24] sm:$0xf]
        %v320 = vld [vmem:[#allocation2 + $0x28] sm:$0xf]
        %v321 = vld [vmem:[#allocation2 + $0x2c] sm:$0xf]
        %v322 = vld [vmem:[#allocation2 + $0x30] sm:$0xf]
        %v323 = vld [vmem:[#allocation2 + $0x34] sm:$0xf]
        %v324 = vld [vmem:[#allocation2 + $0x38] sm:$0xf]
        %v325 = vld [vmem:[#allocation2 + $0x3c] sm:$0xf]
        %v326 = vld [vmem:[%s4] sm:$0x1]
        %v328 = vperm.slane %v326, 0
        %v346 = vunpack.c.l.b16 %v310
        %v347 = vunpack.c.l.b16 %v311
        %v348 = vunpack.c.l.b16 %v312
        %v349 = vunpack.c.l.b16 %v313
        %v350 = vunpack.c.l.b16 %v314
        %v351 = vunpack.c.l.b16 %v315
        %v352 = vunpack.c.l.b16 %v316
        %v353 = vunpack.c.l.b16 %v317
        %v354 = vunpack.c.l.b16 %v318
        %v355 = vunpack.c.l.b16 %v319
        %v356 = vunpack.c.l.b16 %v320
        %v357 = vunpack.c.l.b16 %v321
        %v358 = vunpack.c.l.b16 %v322
        %v359 = vunpack.c.l.b16 %v323
        %v360 = vunpack.c.l.b16 %v324
        %v361 = vunpack.c.l.b16 %v325
        %v362 = vpack.c.b16 %v347, %v346
        %v363 = vpack.c.b16 %v349, %v348
        %v364 = vpack.c.b16 %v351, %v350
        %v365 = vpack.c.b16 %v353, %v352
        %v366 = vpack.c.b16 %v355, %v354
        %v367 = vpack.c.b16 %v357, %v356
        %v368 = vpack.c.b16 %v359, %v358
        %v369 = vpack.c.b16 %v361, %v360
        %378 = vmatpush.bf16.msra.mxu0 %v369
        %379 = vmatpush.bf16.msra.mxu0 %v368
        %380 = vmatpush.bf16.msra.mxu0 %v367
        %381 = vmatpush.bf16.msra.mxu0 %v366
        %382 = vmatpush.bf16.msra.mxu0 %v365
        %383 = vmatpush.bf16.msra.mxu0 %v364
        %384 = vmatpush.bf16.msra.mxu0 %v363
        %385 = vmatpush.bf16.msra.mxu0 %v362
        %386 = vmatmul.bf16.gmra.mxu0 %v308
        %v387 = vpop.f32.mrf.mxu0
        %v388 = vadd.f32 %v328, %v387
        %v389 = vpop.f32.mrf.mxu0
        %v390 = vadd.f32 %v328, %v389
        %391 = vmatmul.bf16.gmra.mxu0 %v309
        %v392 = vpop.f32.mrf.mxu0
        %v393 = vadd.f32 %v328, %v392
        %v394 = vpop.f32.mrf.mxu0
        %v395 = vadd.f32 %v328, %v394
        %396 = vdwg.mxu0
        %v397 = vxor.u32 %v388, 2147483648
        %v398 = vxor.u32 %v390, 2147483648
        %v399 = vxor.u32 %v393, 2147483648
        %v400 = vxor.u32 %v395, 2147483648
        %v401 = vmul.f32 %v397, 1.442695
        %v402 = vpow.pop %v401
        %v403 = vmul.f32 %v398, 1.442695
        %v404 = vpow.pop %v403
        %v405 = vmul.f32 %v399, 1.442695
        %v406 = vpow.pop %v405
        %v407 = vmul.f32 %v400, 1.442695
        %v408 = vpow.pop %v407
        %v409 = vadd.f32 %v402, 1.0
        %v410 = vadd.f32 %v404, 1.0
        %v411 = vadd.f32 %v406, 1.0
        %v412 = vadd.f32 %v408, 1.0
        %v413 = vrcp.pop %v409
        %v414 = vmul.f32 %v409, %v413
        %v415 = vsub.f32 1.0, %v414
        %v416 = vmul.f32 %v413, %v415
        %v417 = vadd.f32 %v413, %v416
        %vm418 = vweird.f32 %v409
        %vm419 = vweird.f32 %v413
        %vm420 = vmor %vm418, %vm419
        %v421 = vsel %vm420, %v413, %v417
        %v422 = vand.u32 2147483647, %v409
        %vm423 = vcmp.eq.f32.partialorder %v422, 8.507059e+37
        %v424 = vand.u32 %v409, 2147483648
        %v425 = vor.u32 1.1754944e-38, %v424
        %v426 = vsel %vm423, %v425, %v421
        %v427 = vmul.f32 1.0, %v426
        %v428 = vrcp.pop %v410
        %v429 = vmul.f32 %v410, %v428
        %v430 = vsub.f32 1.0, %v429
        %v431 = vmul.f32 %v428, %v430
        %v432 = vadd.f32 %v428, %v431
        %vm433 = vweird.f32 %v410
        %vm434 = vweird.f32 %v428
        %vm435 = vmor %vm433, %vm434
        %v436 = vsel %vm435, %v428, %v432
        %v437 = vand.u32 2147483647, %v410
        %vm438 = vcmp.eq.f32.partialorder %v437, 8.507059e+37
        %v439 = vand.u32 %v410, 2147483648
        %v440 = vor.u32 1.1754944e-38, %v439
        %v441 = vsel %vm438, %v440, %v436
        %v442 = vmul.f32 1.0, %v441
        %v443 = vrcp.pop %v411
        %v444 = vmul.f32 %v411, %v443
        %v445 = vsub.f32 1.0, %v444
        %v446 = vmul.f32 %v443, %v445
        %v447 = vadd.f32 %v443, %v446
        %vm448 = vweird.f32 %v411
        %vm449 = vweird.f32 %v443
        %vm450 = vmor %vm448, %vm449
        %v451 = vsel %vm450, %v443, %v447
        %v452 = vand.u32 2147483647, %v411
        %vm453 = vcmp.eq.f32.partialorder %v452, 8.507059e+37
        %v454 = vand.u32 %v411, 2147483648
        %v455 = vor.u32 1.1754944e-38, %v454
        %v456 = vsel %vm453, %v455, %v451
        %v457 = vmul.f32 1.0, %v456
        %v458 = vrcp.pop %v412
        %v459 = vmul.f32 %v412, %v458
        %v460 = vsub.f32 1.0, %v459
        %v461 = vmul.f32 %v458, %v460
        %v462 = vadd.f32 %v458, %v461
        %vm463 = vweird.f32 %v412
        %vm464 = vweird.f32 %v458
        %vm465 = vmor %vm463, %vm464
        %v466 = vsel %vm465, %v458, %v462
        %v467 = vand.u32 2147483647, %v412
        %vm468 = vcmp.eq.f32.partialorder %v467, 8.507059e+37
        %v469 = vand.u32 %v412, 2147483648
        %v470 = vor.u32 1.1754944e-38, %v469
        %v471 = vsel %vm468, %v470, %v466
        %v472 = vmul.f32 1.0, %v471
        %473 = vst [vmem:[%s235] sm:$0xff] %v427
        %474 = vst [vmem:[%s235 + $0x8] sm:$0xff] %v442
        %475 = vst [vmem:[%s235 + $0x10] sm:$0xff] %v457
        %476 = vst [vmem:[%s235 + $0x18] sm:$0xff] %v472
        %s477 = sand.u32 %s138, 1
        %s478 = scalar_lea.sflag [#allocation4], %s477
        %s479 = sand.u32 %s138, 1
        %s480 = smul.addr %s479, 32
        %s481 = scalar_lea.vmem [#allocation5], %s480
        // Predicated region
        $region45: #{tpu_custom_call.1} parent=39 // pred_check
          %p482 = pneg %p148
        $region46: #{tpu_custom_call.1} parent=39 // pred_check_branch
          %484 = sbr.rel (%p482) target = $region48
        $region47: #{tpu_custom_call.1} parent=39 // pred_region
          %s485 = smul.u32 4, %s20
          %487 = vsyncadd %s478, 0
          %s488 = smul.addr %s485, 8
          %s489 = scalar_lea.hbm %s5, %s488
          %s490 = sshll.u32 %s481, 4
          %s491 = int_to_ptr.vmem [resolvable:$true] %s490
          %s492 = sshll.u32 %s489, 4
          %s493 = int_to_ptr.hbm [resolvable:$true] %s492
          %498 = dma.vmem_to_hbm [thread:$0]  %s491, 512, %s493, %s478, 128, 128, 8
        $region48: #{tpu_custom_call.1} parent=39 // pred_fallthru
          _
      $region40: #{tpu_custom_call.1} parent=5 // pred_fallthru
        _
      %p499 = scmp.le.s32.totalorder 2, %s15
      // Predicated region
      $region49: #{tpu_custom_call.1} parent=5 // pred_check
        %p500 = pneg %p499
      $region50: #{tpu_custom_call.1} parent=5 // pred_check_branch
        %502 = sbr.rel (%p500) target = $region52
      $region51: #{tpu_custom_call.1} parent=5 // pred_region
        %s503 = ssub.s32 %s15, 2
        // Predicated region
        $region53: #{tpu_custom_call.1} parent=51 // pred_check
          %p504 = pneg %p154
        $region54: #{tpu_custom_call.1} parent=51 // pred_check_branch
          %506 = sbr.rel (%p504) target = $region56
        $region55: #{tpu_custom_call.1} parent=51 // pred_region
          %s507 = sand.u32 %s139, 1
          %s508 = scalar_lea.sflag [#allocation4], %s507
          %s509 = sand.u32 %s139, 1
          %s510 = smul.addr %s509, 32
          %s511 = scalar_lea.vmem [#allocation5], %s510
          %513 = dma.done %s508, 512
        $region56: #{tpu_custom_call.1} parent=51 // pred_fallthru
          _
      $region52: #{tpu_custom_call.1} parent=5 // pred_fallthru
        _
    $region6: #{tpu_custom_call.1} parent=1 // loop_footer
      %s19 = sadd.s32 1, %s15
    $region7: #{tpu_custom_call.1} parent=1 // loop_footer_branch
      %14 = sbr.rel target = $region3
    $region8: #{tpu_custom_call.1} parent=1 // loop_exit
      _
    %514 = vsyncpa [#allocation3], 1
    %s515 = scalar_lea.sflag [#allocation3], 1
    %516 = vsyncpa %s515, 1
    %517 = vsyncpa [#allocation4], 1
    %s518 = scalar_lea.sflag [#allocation4], 1
    %519 = vsyncpa %s518, 1

// kernel: tpu_custom_call.1
$region0: #{tpu_custom_call.1}
  #allocation0 [shape = 'u32[]', space=smem, size = 0x4, offset = 0x4, fixed_abs, tag = 'smem constant byte address 0x4 - core index']
  #allocation1 [shape = 'u32[72,128]{1,0:T(1,128)}', space=vmem, size = 0x9000, scoped, tag = 'internal scratch']
  %s0 = inlined_call_operand.vmem [shape: bf16[64,32], index: 0, kind: input, shape index: {}]
  %s1 = inlined_call_operand.vmem [shape: bf16[32,128], index: 1, kind: input, shape index: {}]
  %s2 = inlined_call_operand.vmem [shape: f32[1,128], index: 2, kind: input, shape index: {}]
  %s3 = inlined_call_operand.hbm [shape: bf16[128,128], index: 3, kind: input, shape index: {}]
  %s4 = inlined_call_operand.vmem [shape: f32[1,128], index: 4, kind: input, shape index: {}]
  %s5 = inlined_call_operand.hbm [shape: f32[64,128], index: 5, kind: output, shape index: {}]
  %s6 = sld [smem:[#allocation0]]
  $region57: #{tpu_custom_call.1} parent=0
    _
  %s8 = ssub.s32 1, %s6
  %s9 = scalar_select 0, %s8, %s6
  $region1: #{tpu_custom_call.1} parent=0
    #allocation2 [shape = 'u8[32768]{0}', space=vmem, size = 0x8000, scoped, tag = 'input window, operand 3, single buffered']
    #allocation3 [shape = 's32[2]{0}', space=sflag, size = 0x8, scoped, tag = 'scoped memory for tpu_custom_call.1']
    #allocation4 [shape = 's32[2]{0}', space=sflag, size = 0x8, scoped, tag = 'scoped memory for tpu_custom_call.1']
    #allocation5 [shape = 'u8[32768]{0}', space=vmem, size = 0x8000, scoped, tag = 'output window, operand 0']
    %10 = vsyncpa [#allocation3], 0
    %11 = vsyncpa [#allocation4], 0
    %s12 = scalar_lea.sflag [#allocation4], 1
    %13 = vsyncpa %s12, 0
    loop: start=0, step=1, limit=4
    $region2: #{tpu_custom_call.1} parent=1 // loop_pre_header
      _
    $region3: #{tpu_custom_call.1} parent=1 // loop_header
      %s15 = sphi 0, %s19
      %p16 = scmp.ge.s32.totalorder %s15, 4
      %s25 = sphi 0, %s27
      %s28 = sphi 0, %s25
      %s29 = sphi 0, %s28
      %s45 = sphi 0, %s29
      %s49 = sphi 0, %s49
      %s51 = sphi 0, %s49
      %s52 = sphi 0, %s51
      %s66 = sphi 0, %s52
      %s70 = sphi 0, %s70
      %s72 = sphi 0, %s70
      %s73 = sphi 0, %s72
      %s87 = sphi 0, %s73
      %s91 = sphi 0, %s91
      %s93 = sphi 0, %s91
      %s94 = sphi 0, %s93
      %s108 = sphi 0, %s94
      %s112 = sphi 0, %s112
      %s114 = sphi 0, %s112
      %s115 = sphi 0, %s114
      %s129 = sphi 0, %s115
      %s135 = sphi 0, %s137
      %s138 = sphi 0, %s135
      %s139 = sphi 0, %s138
      %s155 = sphi 0, %s139
    $region4: #{tpu_custom_call.1} parent=1 // loop_header_branch
      %18 = sbr.rel (%p16) target = $region8
    $region5: #{tpu_custom_call.1} parent=1 // loop_body
      %s20 = ssub.s32 %s15, 1
      %s21 = ssub.s32 %s15, 2
      %s22 = sadd.s32 %s15, 1
      %s23 = ssub.s32 %s15, %s22
      %p24 = scmp.eq.s32.totalorder %s23, 0
      %s26 = sadd.s32 %s25, 1
      %s27 = scalar_select %p24, %s25, %s26
      %p30 = pneg %p24
      %p31 = scmp.eq.s32.totalorder %s15, 1
      %p32 = por %p30, %p31
      %p33 = scmp.ne.s32.totalorder %s25, %s28
      %p34 = scmp.eq.s32.totalorder %s15, 0
      %p35 = por %p33, %p34
      %p36 = scmp.ne.s32.totalorder %s25, %s28
      %p37 = scmp.eq.s32.totalorder %s20, 1
      %p38 = por %p36, %p37
      %p39 = scmp.ne.s32.totalorder %s28, %s29
      %p40 = scmp.eq.s32.totalorder %s20, 0
      %p41 = por %p39, %p40
      %p42 = scmp.ne.s32.totalorder %s28, %s29
      %p43 = scmp.eq.s32.totalorder %s21, 1
      %p44 = por %p42, %p43
      %p46 = scmp.ne.s32.totalorder %s29, %s45
      %p47 = scmp.eq.s32.totalorder %s21, 0
      %p48 = por %p46, %p47
      %s50 = sadd.s32 %s49, 1
      %p53 = scmp.eq.s32.totalorder %s15, 1
      %p54 = scmp.ne.s32.totalorder %s49, %s51
      %p55 = scmp.eq.s32.totalorder %s15, 0
      %p56 = por %p54, %p55
      %p57 = scmp.ne.s32.totalorder %s49, %s51
      %p58 = scmp.eq.s32.totalorder %s20, 1
      %p59 = por %p57, %p58
      %p60 = scmp.ne.s32.totalorder %s51, %s52
      %p61 = scmp.eq.s32.totalorder %s20, 0
      %p62 = por %p60, %p61
      %p63 = scmp.ne.s32.totalorder %s51, %s52
      %p64 = scmp.eq.s32.totalorder %s21, 1
      %p65 = por %p63, %p64
      %p67 = scmp.ne.s32.totalorder %s52, %s66
      %p68 = scmp.eq.s32.totalorder %s21, 0
      %p69 = por %p67, %p68
      %s71 = sadd.s32 %s70, 1
      %p74 = scmp.eq.s32.totalorder %s15, 1
      %p75 = scmp.ne.s32.totalorder %s70, %s72
      %p76 = scmp.eq.s32.totalorder %s15, 0
      %p77 = por %p75, %p76
      %p78 = scmp.ne.s32.totalorder %s70, %s72
      %p79 = scmp.eq.s32.totalorder %s20, 1
      %p80 = por %p78, %p79
      %p81 = scmp.ne.s32.totalorder %s72, %s73
      %p82 = scmp.eq.s32.totalorder %s20, 0
      %p83 = por %p81, %p82
      %p84 = scmp.ne.s32.totalorder %s72, %s73
      %p85 = scmp.eq.s32.totalorder %s21, 1
      %p86 = por %p84, %p85
      %p88 = scmp.ne.s32.totalorder %s73, %s87
      %p89 = scmp.eq.s32.totalorder %s21, 0
      %p90 = por %p88, %p89
      %s92 = sadd.s32 %s91, 1
      %p95 = scmp.eq.s32.totalorder %s15, 1
      %p96 = scmp.ne.s32.totalorder %s91, %s93
      %p97 = scmp.eq.s32.totalorder %s15, 0
      %p98 = por %p96, %p97
      %p99 = scmp.ne.s32.totalorder %s91, %s93
      %p100 = scmp.eq.s32.totalorder %s20, 1
      %p101 = por %p99, %p100
      %p102 = scmp.ne.s32.totalorder %s93, %s94
      %p103 = scmp.eq.s32.totalorder %s20, 0
      %p104 = por %p102, %p103
      %p105 = scmp.ne.s32.totalorder %s93, %s94
      %p106 = scmp.eq.s32.totalorder %s21, 1
      %p107 = por %p105, %p106
      %p109 = scmp.ne.s32.totalorder %s94, %s108
      %p110 = scmp.eq.s32.totalorder %s21, 0
      %p111 = por %p109, %p110
      %s113 = sadd.s32 %s112, 1
      %p116 = scmp.eq.s32.totalorder %s15, 1
      %p117 = scmp.ne.s32.totalorder %s112, %s114
      %p118 = scmp.eq.s32.totalorder %s15, 0
      %p119 = por %p117, %p118
      %p120 = scmp.ne.s32.totalorder %s112, %s114
      %p121 = scmp.eq.s32.totalorder %s20, 1
      %p122 = por %p120, %p121
      %p123 = scmp.ne.s32.totalorder %s114, %s115
      %p124 = scmp.eq.s32.totalorder %s20, 0
      %p125 = por %p123, %p124
      %p126 = scmp.ne.s32.totalorder %s114, %s115
      %p127 = scmp.eq.s32.totalorder %s21, 1
      %p128 = por %p126, %p127
      %p130 = scmp.ne.s32.totalorder %s115, %s129
      %p131 = scmp.eq.s32.totalorder %s21, 0
      %p132 = por %p130, %p131
      %s133 = ssub.s32 %s15, %s22
      %p134 = scmp.eq.s32.totalorder %s133, 0
      %s136 = sadd.s32 %s135, 1
      %s137 = scalar_select %p134, %s135, %s136
      %p140 = pneg %p134
      %p141 = scmp.eq.s32.totalorder %s15, 1
      %p142 = por %p140, %p141
      %p143 = scmp.ne.s32.totalorder %s135, %s138
      %p144 = scmp.eq.s32.totalorder %s15, 0
      %p145 = por %p143, %p144
      %p146 = scmp.ne.s32.totalorder %s135, %s138
      %p147 = scmp.eq.s32.totalorder %s20, 1
      %p148 = por %p146, %p147
      %p149 = scmp.ne.s32.totalorder %s138, %s139
      %p150 = scmp.eq.s32.totalorder %s20, 0
      %p151 = por %p149, %p150
      %p152 = scmp.ne.s32.totalorder %s138, %s139
      %p153 = scmp.eq.s32.totalorder %s21, 1
      %p154 = por %p152, %p153
      %p156 = scmp.ne.s32.totalorder %s139, %s155
      %p157 = scmp.eq.s32.totalorder %s21, 0
      %p158 = por %p156, %p157
      %p159 = scmp.le.s32.totalorder 1, %s15
      %p160 = scmp.lt.s32.totalorder %s15, 3
      %p161 = pnand %p159, %p160
      %p162 = pneg %p161
      // Predicated region
      $region9: #{tpu_custom_call.1} parent=5 // pred_check
        _
      $region10: #{tpu_custom_call.1} parent=5 // pred_check_branch
        %164 = sbr.rel (%p161) target = $region12
      $region11: #{tpu_custom_call.1} parent=5 // pred_region
        %s165 = ssub.s32 %s15, 1
        // Predicated region
        $region13: #{tpu_custom_call.1} parent=11 // pred_check
          %p166 = pneg %p62
        $region14: #{tpu_custom_call.1} parent=11 // pred_check_branch
          %168 = sbr.rel (%p166) target = $region16
        $region15: #{tpu_custom_call.1} parent=11 // pred_region
          _
        $region16: #{tpu_custom_call.1} parent=11 // pred_fallthru
          _
        // Predicated region
        $region17: #{tpu_custom_call.1} parent=11 // pred_check
          %p169 = pneg %p83
        $region18: #{tpu_custom_call.1} parent=11 // pred_check_branch
          %171 = sbr.rel (%p169) target = $region20
        $region19: #{tpu_custom_call.1} parent=11 // pred_region
          _
        $region20: #{tpu_custom_call.1} parent=11 // pred_fallthru
          _
        // Predicated region
        $region21: #{tpu_custom_call.1} parent=11 // pred_check
          %p172 = pneg %p104
        $region22: #{tpu_custom_call.1} parent=11 // pred_check_branch
          %174 = sbr.rel (%p172) target = $region24
        $region23: #{tpu_custom_call.1} parent=11 // pred_region
          %176 = vsyncadd [#allocation3], 0
          %s177 = sshll.u32 %s3, 4
          %s178 = int_to_ptr.hbm [resolvable:$true] %s177
          %s179 = sshll.u32 [#allocation2], 4
          %s180 = int_to_ptr.vmem [resolvable:$true] %s179
          %185 = dma.hbm_to_vmem [thread:$0]  %s178, 1024, %s180, [#allocation3], 64, 64, 4
        $region24: #{tpu_custom_call.1} parent=11 // pred_fallthru
          _
        // Predicated region
        $region25: #{tpu_custom_call.1} parent=11 // pred_check
          %p186 = pneg %p125
        $region26: #{tpu_custom_call.1} parent=11 // pred_check_branch
          %188 = sbr.rel (%p186) target = $region28
        $region27: #{tpu_custom_call.1} parent=11 // pred_region
          _
        $region28: #{tpu_custom_call.1} parent=11 // pred_fallthru
          _
      $region12: #{tpu_custom_call.1} parent=5 // pred_fallthru
        _
      %p189 = scmp.lt.s32.totalorder %s15, 2
      // Predicated region
      $region29: #{tpu_custom_call.1} parent=5 // pred_check
        %p190 = pneg %p189
      $region30: #{tpu_custom_call.1} parent=5 // pred_check_branch
        %192 = sbr.rel (%p190) target = $region32
      $region31: #{tpu_custom_call.1} parent=5 // pred_region
        // Predicated region
        $region33: #{tpu_custom_call.1} parent=31 // pred_check
          %p193 = pneg %p35
        $region34: #{tpu_custom_call.1} parent=31 // pred_check_branch
          %195 = sbr.rel (%p193) target = $region36
        $region35: #{tpu_custom_call.1} parent=31 // pred_region
          %s196 = smul.u32 4, %s15
          %p197 = scmp.lt.s32.totalorder %s196, 7
          %s198 = scalar_select %p197, %s196, 7
          %s199 = smul.addr %s198, 4
          %s200 = scalar_lea.vmem %s0, %s199
          %s201 = smul.u32 4, %s15
        $region36: #{tpu_custom_call.1} parent=31 // pred_fallthru
          _
      $region32: #{tpu_custom_call.1} parent=5 // pred_fallthru
        _
      %p202 = scmp.le.s32.totalorder 1, %s15
      %p203 = scmp.lt.s32.totalorder %s15, 3
      %p204 = pnand %p202, %p203
      %p205 = pneg %p204
      // Predicated region
      $region37: #{tpu_custom_call.1} parent=5 // pred_check
        _
      $region38: #{tpu_custom_call.1} parent=5 // pred_check_branch
        %207 = sbr.rel (%p204) target = $region40
      $region39: #{tpu_custom_call.1} parent=5 // pred_region
        %s208 = ssub.s32 %s15, 1
        // Predicated region
        $region41: #{tpu_custom_call.1} parent=39 // pred_check
          %p209 = pneg %p104
        $region42: #{tpu_custom_call.1} parent=39 // pred_check_branch
          %211 = sbr.rel (%p209) target = $region44
        $region43: #{tpu_custom_call.1} parent=39 // pred_region
          %213 = dma.done [#allocation3], 1024
        $region44: #{tpu_custom_call.1} parent=39 // pred_fallthru
          _
        %s214 = smul.u32 4, %s20
        %p215 = scmp.lt.s32.totalorder %s214, 7
        %s216 = scalar_select %p215, %s214, 7
        %s217 = smul.addr %s216, 4
        %s218 = scalar_lea.vmem %s0, %s217
        %p219 = pneg %p41
        %p220 = pneg %p38
        %p221 = pneg %p62
        %p222 = pneg %p59
        %p223 = pneg %p83
        %p224 = pneg %p80
        %p225 = pneg %p104
        %p226 = pneg %p101
        %p227 = pneg %p125
        %p228 = pneg %p122
        %p229 = pneg %p151
        %p230 = pneg %p148
        %s231 = sand.u32 %s138, 1
        %s232 = scalar_lea.sflag [#allocation4], %s231
        %s233 = sand.u32 %s138, 1
        %s234 = smul.addr %s233, 32
        %s235 = scalar_lea.vmem [#allocation5], %s234
        %s236 = smul.u32 4, %s20
        %p237 = scmp.lt.s32.totalorder %s236, 7
        %s238 = scalar_select %p237, %s236, 7
        %s239 = smul.addr %s238, 4
        %s240 = scalar_lea.vmem %s0, %s239
        %s241 = smul.u32 4, %s20
        %s242 = smul.u32 4, %s20
        %v244 = vld [vmem:[%s240] sm:$0xf]
        %v245 = vld [vmem:[%s240 + $0x4] sm:$0xf]
        %v246 = vld [vmem:[%s240 + $0x8] sm:$0xf]
        %v247 = vld [vmem:[%s240 + $0xc] sm:$0xf]
        %v248 = vld [vmem:[%s1] sm:$0xf]
        %v249 = vld [vmem:[%s1 + $0x4] sm:$0xf]
        %v250 = vld [vmem:[%s1 + $0x8] sm:$0xf]
        %v251 = vld [vmem:[%s1 + $0xc] sm:$0xf]
        %v252 = vld [vmem:[%s2] sm:$0x1]
        %v254 = vperm.slane %v252, 0
        %v260 = vunpack.c.l.b16 %v244
        %v261 = vunpack.c.l.b16 %v245
        %v262 = vunpack.c.l.b16 %v246
        %v263 = vunpack.c.l.b16 %v247
        %v264 = vpack.c.b16 %v261, %v260
        %v265 = vpack.c.b16 %v263, %v262
        %v270 = vunpack.c.l.b16 %v248
        %v271 = vunpack.c.l.b16 %v249
        %v272 = vunpack.c.l.b16 %v250
        %v273 = vunpack.c.l.b16 %v251
        %v274 = vpack.c.b16 %v271, %v270
        %v275 = vpack.c.b16 %v273, %v272
        %vm278 = vcmask 261120
        %v280 = vsel %vm278, %v264, 0
        %v283 = vsel %vm278, %v265, 0
        %285 = vmatpush.bf16.msra.mxu0 0
        %286 = vmatpush.bf16.msra.mxu0 0
        %287 = vmatpush.bf16.msra.mxu0 0
        %288 = vmatpush.bf16.msra.mxu0 0
        %289 = vmatpush.bf16.msra.mxu0 0
        %290 = vmatpush.bf16.msra.mxu0 0
        %291 = vmatpush.bf16.msra.mxu0 %v275
        %292 = vmatpush.bf16.msra.mxu0 %v274
        %293 = vmatmul.bf16.gmra.mxu0 %v280
        %v294 = vpop.f32.mrf.mxu0
        %v295 = vadd.f32 %v254, %v294
        %v296 = vpop.f32.mrf.mxu0
        %v297 = vadd.f32 %v254, %v296
        %298 = vmatmul.bf16.gmra.mxu0 %v283
        %v299 = vpop.f32.mrf.mxu0
        %v300 = vadd.f32 %v254, %v299
        %v301 = vpop.f32.mrf.mxu0
        %v302 = vadd.f32 %v254, %v301
        %303 = vdwg.mxu0
        %v304 = vmax.f32 %v295, 0.0
        %v305 = vmax.f32 %v297, 0.0
        %v306 = vmax.f32 %v300, 0.0
        %v307 = vmax.f32 %v302, 0.0
        %v308 = vpack.c.bf16 %v305, %v304
        %v309 = vpack.c.bf16 %v307, %v306
        %v310 = vld [vmem:[#allocation2] sm:$0xf]
        %v311 = vld [vmem:[#allocation2 + $0x4] sm:$0xf]
        %v312 = vld [vmem:[#allocation2 + $0x8] sm:$0xf]
        %v313 = vld [vmem:[#allocation2 + $0xc] sm:$0xf]
        %v314 = vld [vmem:[#allocation2 + $0x10] sm:$0xf]
        %v315 = vld [vmem:[#allocation2 + $0x14] sm:$0xf]
        %v316 = vld [vmem:[#allocation2 + $0x18] sm:$0xf]
        %v317 = vld [vmem:[#allocation2 + $0x1c] sm:$0xf]
        %v318 = vld [vmem:[#allocation2 + $0x20] sm:$0xf]
        %v319 = vld [vmem:[#allocation2 + $0x24] sm:$0xf]
        %v320 = vld [vmem:[#allocation2 + $0x28] sm:$0xf]
        %v321 = vld [vmem:[#allocation2 + $0x2c] sm:$0xf]
        %v322 = vld [vmem:[#allocation2 + $0x30] sm:$0xf]
        %v323 = vld [vmem:[#allocation2 + $0x34] sm:$0xf]
        %v324 = vld [vmem:[#allocation2 + $0x38] sm:$0xf]
        %v325 = vld [vmem:[#allocation2 + $0x3c] sm:$0xf]
        %v326 = vld [vmem:[%s4] sm:$0x1]
        %v328 = vperm.slane %v326, 0
        %v346 = vunpack.c.l.b16 %v310
        %v347 = vunpack.c.l.b16 %v311
        %v348 = vunpack.c.l.b16 %v312
        %v349 = vunpack.c.l.b16 %v313
        %v350 = vunpack.c.l.b16 %v314
        %v351 = vunpack.c.l.b16 %v315
        %v352 = vunpack.c.l.b16 %v316
        %v353 = vunpack.c.l.b16 %v317
        %v354 = vunpack.c.l.b16 %v318
        %v355 = vunpack.c.l.b16 %v319
        %v356 = vunpack.c.l.b16 %v320
        %v357 = vunpack.c.l.b16 %v321
        %v358 = vunpack.c.l.b16 %v322
        %v359 = vunpack.c.l.b16 %v323
        %v360 = vunpack.c.l.b16 %v324
        %v361 = vunpack.c.l.b16 %v325
        %v362 = vpack.c.b16 %v347, %v346
        %v363 = vpack.c.b16 %v349, %v348
        %v364 = vpack.c.b16 %v351, %v350
        %v365 = vpack.c.b16 %v353, %v352
        %v366 = vpack.c.b16 %v355, %v354
        %v367 = vpack.c.b16 %v357, %v356
        %v368 = vpack.c.b16 %v359, %v358
        %v369 = vpack.c.b16 %v361, %v360
        %378 = vmatpush.bf16.msra.mxu0 %v369
        %379 = vmatpush.bf16.msra.mxu0 %v368
        %380 = vmatpush.bf16.msra.mxu0 %v367
        %381 = vmatpush.bf16.msra.mxu0 %v366
        %382 = vmatpush.bf16.msra.mxu0 %v365
        %383 = vmatpush.bf16.msra.mxu0 %v364
        %384 = vmatpush.bf16.msra.mxu0 %v363
        %385 = vmatpush.bf16.msra.mxu0 %v362
        %386 = vmatmul.bf16.gmra.mxu0 %v308
        %v387 = vpop.f32.mrf.mxu0
        %v388 = vadd.f32 %v328, %v387
        %v389 = vpop.f32.mrf.mxu0
        %v390 = vadd.f32 %v328, %v389
        %391 = vmatmul.bf16.gmra.mxu0 %v309
        %v392 = vpop.f32.mrf.mxu0
        %v393 = vadd.f32 %v328, %v392
        %v394 = vpop.f32.mrf.mxu0
        %v395 = vadd.f32 %v328, %v394
        %396 = vdwg.mxu0
        %v397 = vxor.u32 %v388, 2147483648
        %v398 = vxor.u32 %v390, 2147483648
        %v399 = vxor.u32 %v393, 2147483648
        %v400 = vxor.u32 %v395, 2147483648
        %v401 = vmul.f32 %v397, 1.442695
        %v402 = vpow.pop %v401
        %v403 = vmul.f32 %v398, 1.442695
        %v404 = vpow.pop %v403
        %v405 = vmul.f32 %v399, 1.442695
        %v406 = vpow.pop %v405
        %v407 = vmul.f32 %v400, 1.442695
        %v408 = vpow.pop %v407
        %v409 = vadd.f32 %v402, 1.0
        %v410 = vadd.f32 %v404, 1.0
        %v411 = vadd.f32 %v406, 1.0
        %v412 = vadd.f32 %v408, 1.0
        %v413 = vrcp.pop %v409
        %v414 = vmul.f32 %v409, %v413
        %v415 = vsub.f32 1.0, %v414
        %v416 = vmul.f32 %v413, %v415
        %v417 = vadd.f32 %v413, %v416
        %vm418 = vweird.f32 %v409
        %vm419 = vweird.f32 %v413
        %vm420 = vmor %vm418, %vm419
        %v421 = vsel %vm420, %v413, %v417
        %v422 = vand.u32 2147483647, %v409
        %vm423 = vcmp.eq.f32.partialorder %v422, 8.507059e+37
        %v424 = vand.u32 %v409, 2147483648
        %v425 = vor.u32 1.1754944e-38, %v424
        %v426 = vsel %vm423, %v425, %v421
        %v427 = vmul.f32 1.0, %v426
        %v428 = vrcp.pop %v410
        %v429 = vmul.f32 %v410, %v428
        %v430 = vsub.f32 1.0, %v429
        %v431 = vmul.f32 %v428, %v430
        %v432 = vadd.f32 %v428, %v431
        %vm433 = vweird.f32 %v410
        %vm434 = vweird.f32 %v428
        %vm435 = vmor %vm433, %vm434
        %v436 = vsel %vm435, %v428, %v432
        %v437 = vand.u32 2147483647, %v410
        %vm438 = vcmp.eq.f32.partialorder %v437, 8.507059e+37
        %v439 = vand.u32 %v410, 2147483648
        %v440 = vor.u32 1.1754944e-38, %v439
        %v441 = vsel %vm438, %v440, %v436
        %v442 = vmul.f32 1.0, %v441
        %v443 = vrcp.pop %v411
        %v444 = vmul.f32 %v411, %v443
        %v445 = vsub.f32 1.0, %v444
        %v446 = vmul.f32 %v443, %v445
        %v447 = vadd.f32 %v443, %v446
        %vm448 = vweird.f32 %v411
        %vm449 = vweird.f32 %v443
        %vm450 = vmor %vm448, %vm449
        %v451 = vsel %vm450, %v443, %v447
        %v452 = vand.u32 2147483647, %v411
        %vm453 = vcmp.eq.f32.partialorder %v452, 8.507059e+37
        %v454 = vand.u32 %v411, 2147483648
        %v455 = vor.u32 1.1754944e-38, %v454
        %v456 = vsel %vm453, %v455, %v451
        %v457 = vmul.f32 1.0, %v456
        %v458 = vrcp.pop %v412
        %v459 = vmul.f32 %v412, %v458
        %v460 = vsub.f32 1.0, %v459
        %v461 = vmul.f32 %v458, %v460
        %v462 = vadd.f32 %v458, %v461
        %vm463 = vweird.f32 %v412
        %vm464 = vweird.f32 %v458
        %vm465 = vmor %vm463, %vm464
        %v466 = vsel %vm465, %v458, %v462
        %v467 = vand.u32 2147483647, %v412
        %vm468 = vcmp.eq.f32.partialorder %v467, 8.507059e+37
        %v469 = vand.u32 %v412, 2147483648
        %v470 = vor.u32 1.1754944e-38, %v469
        %v471 = vsel %vm468, %v470, %v466
        %v472 = vmul.f32 1.0, %v471
        %473 = vst [vmem:[%s235] sm:$0xff] %v427
        %474 = vst [vmem:[%s235 + $0x8] sm:$0xff] %v442
        %475 = vst [vmem:[%s235 + $0x10] sm:$0xff] %v457
        %476 = vst [vmem:[%s235 + $0x18] sm:$0xff] %v472
        %s477 = sand.u32 %s138, 1
        %s478 = scalar_lea.sflag [#allocation4], %s477
        %s479 = sand.u32 %s138, 1
        %s480 = smul.addr %s479, 32
        %s481 = scalar_lea.vmem [#allocation5], %s480
        // Predicated region
        $region45: #{tpu_custom_call.1} parent=39 // pred_check
          %p482 = pneg %p148
        $region46: #{tpu_custom_call.1} parent=39 // pred_check_branch
          %484 = sbr.rel (%p482) target = $region48
        $region47: #{tpu_custom_call.1} parent=39 // pred_region
          %s485 = smul.u32 4, %s20
          %487 = vsyncadd %s478, 0
          %s488 = smul.addr %s485, 8
          %s489 = scalar_lea.hbm %s5, %s488
          %s490 = sshll.u32 %s481, 4
          %s491 = int_to_ptr.vmem [resolvable:$true] %s490
          %s492 = sshll.u32 %s489, 4
          %s493 = int_to_ptr.hbm [resolvable:$true] %s492
          %498 = dma.vmem_to_hbm [thread:$0]  %s491, 512, %s493, %s478, 128, 128, 8
        $region48: #{tpu_custom_call.1} parent=39 // pred_fallthru
          _
      $region40: #{tpu_custom_call.1} parent=5 // pred_fallthru
        _
      %p499 = scmp.le.s32.totalorder 2, %s15
      // Predicated region
      $region49: #{tpu_custom_call.1} parent=5 // pred_check
        %p500 = pneg %p499
      $region50: #{tpu_custom_call.1} parent=5 // pred_check_branch
        %502 = sbr.rel (%p500) target = $region52
      $region51: #{tpu_custom_call.1} parent=5 // pred_region
        %s503 = ssub.s32 %s15, 2
        // Predicated region
        $region53: #{tpu_custom_call.1} parent=51 // pred_check
          %p504 = pneg %p154
        $region54: #{tpu_custom_call.1} parent=51 // pred_check_branch
          %506 = sbr.rel (%p504) target = $region56
        $region55: #{tpu_custom_call.1} parent=51 // pred_region
          %s507 = sand.u32 %s139, 1
          %s508 = scalar_lea.sflag [#allocation4], %s507
          %s509 = sand.u32 %s139, 1
          %s510 = smul.addr %s509, 32
          %s511 = scalar_lea.vmem [#allocation5], %s510
          %513 = dma.done %s508, 512
        $region56: #{tpu_custom_call.1} parent=51 // pred_fallthru
          _
      $region52: #{tpu_custom_call.1} parent=5 // pred_fallthru
        _
    $region6: #{tpu_custom_call.1} parent=1 // loop_footer
      %s19 = sadd.s32 1, %s15
    $region7: #{tpu_custom_call.1} parent=1 // loop_footer_branch
      %14 = sbr.rel target = $region3
    $region8: #{tpu_custom_call.1} parent=1 // loop_exit
      _
    %514 = vsyncpa [#allocation3], 1
    %s515 = scalar_lea.sflag [#allocation3], 1
    %516 = vsyncpa %s515, 1
    %517 = vsyncpa [#allocation4], 1
    %s518 = scalar_lea.sflag [#allocation4], 1
    %519 = vsyncpa %s518, 1

</llo_original>
